<compile_context>
chip_gen: v6e
topology: v6e:2x2x1
jax: 0.10.0
libtpu: 0.0.40
codegen_flags: <defaults>
</compile_context>

<pallas_src>
import numpy as np
import jax
import jax.numpy as jnp
from jax.experimental import pallas as pl
from jax.experimental.pallas import tpu as pltpu


# ----------------------------------------------------------------------------
# Parameter construction (mirrors VolterraKernel2d.get_superdiogonal_mask)
# ----------------------------------------------------------------------------
def superdiagonal_mask(kernel_space_size: int, order: int) -> np.ndarray:
    """Bool mask of shape (K**order,). True = entry gets zeroed (masked_fill)."""
    K = kernel_space_size
    if order == 1:
        return np.zeros(K, dtype=bool)
    idx = np.indices([K] * order).reshape(order, -1)   # (order, K**order)
    # combinations with replacement == non-decreasing index tuples
    nondecreasing = np.all(idx[:-1] <= idx[1:], axis=0)
    return ~nondecreasing                               # True everywhere except super-diagonal


# ----------------------------------------------------------------------------
# Pallas kernel factory
# ----------------------------------------------------------------------------
def _make_volterra_kernel(order: int, K: int, apply_mult: bool):
    """Kernel over a block x:(BCB, K, TL) -> out:(BCB, K**order, TL)."""

    def kernel(*refs):
        if apply_mult:
            x_ref, mult_ref, o_ref = refs
        else:
            x_ref, o_ref = refs
            mult_ref = None

        if order == 1:
            # Pure copy (masking/scaling are forced off for order==1).
            o_ref[...] = x_ref[...].astype(o_ref.dtype)
            return

        xb = x_ref[...].astype(jnp.float32)            # (BCB, K, TL), f32 math

        # (order-1)-fold outer product, flattened with the newest index fastest
        # (same row-major flattening as torch's (..., Kp, 1) @ (..., 1, K)).
        cur = xb                                       # (BCB, K**1, TL)
        for _ in range(order - 2):
            kp = cur.shape[1]
            cur = (cur[:, :, None, :] * xb[:, None, :, :]).reshape(
                cur.shape[0], kp * K, cur.shape[2])
        kprev = cur.shape[1]                           # K**(order-1)

        if apply_mult:
            mult_all = mult_ref[...]                   # (K**order, 1), f32

        # Stream the final fold: output rows [i*kprev, (i+1)*kprev) = x[i] * cur,
        # with fused mask*scale applied per row-block before the store.  The
        # unrolled loop lets the scheduler interleave stores with multiplies
        # instead of one terminal store burst (matters most on v5e's 1 vst slot).
        for i in range(K):
            blk = cur * xb[:, i:i + 1, :]              # (BCB, kprev, TL)
            if apply_mult:
                blk = blk * mult_all[i * kprev:(i + 1) * kprev, :]
            o_ref[:, pl.ds(i * kprev, kprev), :] = blk.astype(o_ref.dtype)

    return kernel


# ----------------------------------------------------------------------------
# Wrapper
# ----------------------------------------------------------------------------
def volterra_kernel_2d(x, kernel_space_size, order=1, masking=True, scaling=True):
    """x: (B, C*K, L) float  ->  (B, C*K**order, L), matching VolterraKernel2d.forward."""
    assert x.ndim == 3, "expected input of shape (B, C*kernel_space_size, L)"
    K = int(kernel_space_size)
    order = int(order)
    masking = bool(masking) if order > 1 else False
    scaling = bool(scaling) if order > 1 else False

    B, CK, L = x.shape
    C = CK // K
    Ko = K ** order
    BC = B * C

    # ---- free layout view of the PyTorch (B, C*K, L) tensor: no HBM transpose ----
    x3 = x.reshape(BC, K, L)

    # ---- fused per-row multiplier: mask keep (0/1) * 1/sqrt(n_kept) ----
    mask = superdiagonal_mask(K, order)                 # (Ko,) bool, True = zeroed
    n_kept = int((~mask).sum())
    mult_np = np.ones(Ko, dtype=np.float32)
    if masking:
        mult_np *= (~mask).astype(np.float32)
    if scaling:
        mult_np *= np.float32(1.0 / np.sqrt(float(n_kept)))
    apply_mult = masking or scaling

    # ---- tiling: lane tile along L (multiple of 128 or full L), and group
    #      several (b, c) slabs per grid step so each step moves >= ~1 MB,
    #      amortizing the ~0.35 us/step overhead while staying well under the
    #      scoped VMEM limit on all generations (v7x has the smallest VMEM). ----
    LANE = 128
    if L <= LANE:
        TL = L                                          # full (short) lane dim
    else:
        TL = min(2048, pl.cdiv(L, LANE) * LANE)

    VMEM_BUDGET = 8 << 20                               # double-buffered in+out
    per_lane_bytes = (K + Ko) * 4 * 2                   # f32, x2 for double buffering
    lane_cap = max(TL, VMEM_BUDGET // per_lane_bytes)
    target_lanes = min(8192, lane_cap)
    BCB = int(max(1, min(BC, target_lanes // TL)))

    grid = (pl.cdiv(BC, BCB), pl.cdiv(L, TL))

    in_specs = [pl.BlockSpec((BCB, K, TL), lambda bc, l: (bc, 0, l))]
    args = [x3]
    if apply_mult:
        in_specs.append(pl.BlockSpec((Ko, 1), lambda bc, l: (0, 0)))  # resident
        args.append(jnp.asarray(mult_np).reshape(Ko, 1))

    kern = _make_volterra_kernel(order=order, K=K, apply_mult=apply_mult)

    out3 = pl.pallas_call(
        kern,
        out_shape=jax.ShapeDtypeStruct((BC, Ko, L), x.dtype),
        grid=grid,
        in_specs=in_specs,
        out_specs=pl.BlockSpec((BCB, Ko, TL), lambda bc, l: (bc, 0, l)),
        compiler_params=pltpu.CompilerParams(
            dimension_semantics=("parallel", "parallel")),  # megacore sharding on v7x
    )(*args)

    # (B*C, Ko, L) -> (B, C*Ko, L): free reshape (matches torch reshape order).
    return out3.reshape(B, C * Ko, L)


# ----------------------------------------------------------------------------
# Pure-numpy reference replicating the PyTorch forward exactly.
# ----------------------------------------------------------------------------
def reference_forward(x_np, kernel_space_size, order=1, masking=True, scaling=True):
    K = kernel_space_size
    masking = masking if order > 1 else False
    scaling = scaling if order > 1 else False
    B = x_np.shape[0]
    L = x_np.shape[2]
    x = x_np.reshape(B, -1, K, L).transpose(0, 1, 3, 2)        # (B, C, L, K)
    kernel = x[..., None, :]                                    # (B, C, L, 1, K)
    for _ in range(order - 1):
        x = x.reshape(B, x.shape[1], L, -1)
        x = x[..., None]                                        # (B, C, L, Kp, 1)
        x = x @ kernel                                          # (B, C, L, Kp, K)
    x = x.reshape(B, x.shape[1], L, -1)
    mask = superdiagonal_mask(K, order)
    if masking:
        x = np.where(mask[None, None, None, :], 0.0, x)
    x = x.transpose(0, 1, 3, 2)
    if scaling:
        x = x * (1.0 / np.sqrt(float((~mask).sum())))
    return x.reshape(B, -1, L)


if __name__ == "__main__":
    key = jax.random.PRNGKey(0)
    k1, k2 = jax.random.split(key)

    K = 9       # e.g. an unfolded 3x3 conv window
    ORDER = 2   # second-order Volterra term

    # 1) small shape matching the module's (B, C*K, L) input convention
    B, C, L = 2, 4, 16
    x = jax.random.normal(k1, (B, C * K, L), dtype=jnp.float32)
    out = jax.block_until_ready(
        volterra_kernel_2d(x, K, order=ORDER, masking=True, scaling=True))
    assert out.shape == (B, C * K ** ORDER, L), out.shape
    ref = reference_forward(np.asarray(x), K, order=ORDER, masking=True, scaling=True)
    np.testing.assert_allclose(np.asarray(out), ref, rtol=1e-5, atol=1e-5)

    # 2) lane-tiled path (L > 128, uneven tail handled by cdiv grid + clipped writes)
    B2, C2, L2 = 1, 2, 200
    x2 = jax.random.normal(k2, (B2, C2 * K, L2), dtype=jnp.float32)
    out2 = jax.block_until_ready(
        volterra_kernel_2d(x2, K, order=2, masking=True, scaling=True))
    ref2 = reference_forward(np.asarray(x2), K, order=2, masking=True, scaling=True)
    np.testing.assert_allclose(np.asarray(out2), ref2, rtol=1e-5, atol=1e-5)

    # 3) order=1 path (identity copy; masking/scaling forced off as in the module)
    out3 = jax.block_until_ready(
        volterra_kernel_2d(x, K, order=1, masking=True, scaling=True))
    ref3 = reference_forward(np.asarray(x), K, order=1, masking=True, scaling=True)
    np.testing.assert_allclose(np.asarray(out3), ref3, rtol=1e-6, atol=1e-6)

    print("KERNEL_OK")
</pallas_src>

<mosaic_0001>
module attributes {stable_mosaic.version = 11 : i64} {
  func.func @kernel(%arg0: i32, %arg1: i32, %arg2: memref<8x9x16xf32, #tpu.memory_space<vmem>>, %arg3: memref<81x1xf32, #tpu.memory_space<vmem>>, %arg4: memref<8x81x16xf32, #tpu.memory_space<vmem>>) attributes {dimension_semantics = [#tpu.dimension_semantics<parallel>, #tpu.dimension_semantics<parallel>], iteration_bounds = array<i64: 1, 1>, scalar_prefetch = 0 : i64, scratch_operands = 0 : i64, tpu.core_type = #tpu.core_type<tc>, window_params = [{transform_indices = @transform_0, window_bounds = array<i64: 8, 9, 16>}, {pipeline_mode = #tpu.pipeline_mode<synchronous>, transform_indices = @transform_1, window_bounds = array<i64: 81, 1>}, {transform_indices = @transform_2, window_bounds = array<i64: 8, 81, 16>}]} {
    %c0 = arith.constant 0 : index
    %c0_0 = arith.constant 0 : index
    %c0_1 = arith.constant 0 : index
    %0 = vector.load %arg2[%c0, %c0_0, %c0_1] : memref<8x9x16xf32, #tpu.memory_space<vmem>>, vector<8x9x16xf32>
    %c0_2 = arith.constant 0 : index
    %c0_3 = arith.constant 0 : index
    %1 = vector.load %arg3[%c0_2, %c0_3] : memref<81x1xf32, #tpu.memory_space<vmem>>, vector<81x1xf32>
    %2 = vector.extract_strided_slice %0 {offsets = [0, 0, 0], sizes = [8, 1, 16], strides = [1, 1, 1]} : vector<8x9x16xf32> to vector<8x1x16xf32>
    %3 = vector.broadcast %2 : vector<8x1x16xf32> to vector<8x9x16xf32>
    %4 = arith.mulf %0, %3 : vector<8x9x16xf32>
    %5 = vector.extract_strided_slice %1 {offsets = [0, 0], sizes = [9, 1], strides = [1, 1]} : vector<81x1xf32> to vector<9x1xf32>
    %6 = vector.shape_cast %5 : vector<9x1xf32> to vector<1x9x1xf32>
    %7 = vector.broadcast %6 : vector<1x9x1xf32> to vector<8x9x16xf32>
    %8 = arith.mulf %4, %7 : vector<8x9x16xf32>
    %c0_4 = arith.constant 0 : index
    %c0_5 = arith.constant 0 : index
    %c0_6 = arith.constant 0 : index
    %9 = vector.load %arg4[%c0_4, %c0_5, %c0_6] : memref<8x81x16xf32, #tpu.memory_space<vmem>>, vector<8x9x16xf32>
    tpu.vector_store %arg4[%c0_4, %c0_5, %c0_6], %8 {strides = array<i32>} : memref<8x81x16xf32, #tpu.memory_space<vmem>>, vector<8x9x16xf32>,
    %10 = vector.extract_strided_slice %0 {offsets = [0, 1, 0], sizes = [8, 1, 16], strides = [1, 1, 1]} : vector<8x9x16xf32> to vector<8x1x16xf32>
    %11 = vector.broadcast %10 : vector<8x1x16xf32> to vector<8x9x16xf32>
    %12 = arith.mulf %0, %11 : vector<8x9x16xf32>
    %13 = vector.extract_strided_slice %1 {offsets = [9, 0], sizes = [9, 1], strides = [1, 1]} : vector<81x1xf32> to vector<9x1xf32>
    %14 = vector.shape_cast %13 : vector<9x1xf32> to vector<1x9x1xf32>
    %15 = vector.broadcast %14 : vector<1x9x1xf32> to vector<8x9x16xf32>
    %16 = arith.mulf %12, %15 : vector<8x9x16xf32>
    %c0_7 = arith.constant 0 : index
    %c9 = arith.constant 9 : index
    %c0_8 = arith.constant 0 : index
    %17 = vector.load %arg4[%c0_7, %c9, %c0_8] : memref<8x81x16xf32, #tpu.memory_space<vmem>>, vector<8x9x16xf32>
    tpu.vector_store %arg4[%c0_7, %c9, %c0_8], %16 {strides = array<i32>} : memref<8x81x16xf32, #tpu.memory_space<vmem>>, vector<8x9x16xf32>,
    %18 = vector.extract_strided_slice %0 {offsets = [0, 2, 0], sizes = [8, 1, 16], strides = [1, 1, 1]} : vector<8x9x16xf32> to vector<8x1x16xf32>
    %19 = vector.broadcast %18 : vector<8x1x16xf32> to vector<8x9x16xf32>
    %20 = arith.mulf %0, %19 : vector<8x9x16xf32>
    %21 = vector.extract_strided_slice %1 {offsets = [18, 0], sizes = [9, 1], strides = [1, 1]} : vector<81x1xf32> to vector<9x1xf32>
    %22 = vector.shape_cast %21 : vector<9x1xf32> to vector<1x9x1xf32>
    %23 = vector.broadcast %22 : vector<1x9x1xf32> to vector<8x9x16xf32>
    %24 = arith.mulf %20, %23 : vector<8x9x16xf32>
    %c0_9 = arith.constant 0 : index
    %c18 = arith.constant 18 : index
    %c0_10 = arith.constant 0 : index
    %25 = vector.load %arg4[%c0_9, %c18, %c0_10] : memref<8x81x16xf32, #tpu.memory_space<vmem>>, vector<8x9x16xf32>
    tpu.vector_store %arg4[%c0_9, %c18, %c0_10], %24 {strides = array<i32>} : memref<8x81x16xf32, #tpu.memory_space<vmem>>, vector<8x9x16xf32>,
    %26 = vector.extract_strided_slice %0 {offsets = [0, 3, 0], sizes = [8, 1, 16], strides = [1, 1, 1]} : vector<8x9x16xf32> to vector<8x1x16xf32>
    %27 = vector.broadcast %26 : vector<8x1x16xf32> to vector<8x9x16xf32>
    %28 = arith.mulf %0, %27 : vector<8x9x16xf32>
    %29 = vector.extract_strided_slice %1 {offsets = [27, 0], sizes = [9, 1], strides = [1, 1]} : vector<81x1xf32> to vector<9x1xf32>
    %30 = vector.shape_cast %29 : vector<9x1xf32> to vector<1x9x1xf32>
    %31 = vector.broadcast %30 : vector<1x9x1xf32> to vector<8x9x16xf32>
    %32 = arith.mulf %28, %31 : vector<8x9x16xf32>
    %c0_11 = arith.constant 0 : index
    %c27 = arith.constant 27 : index
    %c0_12 = arith.constant 0 : index
    %33 = vector.load %arg4[%c0_11, %c27, %c0_12] : memref<8x81x16xf32, #tpu.memory_space<vmem>>, vector<8x9x16xf32>
    tpu.vector_store %arg4[%c0_11, %c27, %c0_12], %32 {strides = array<i32>} : memref<8x81x16xf32, #tpu.memory_space<vmem>>, vector<8x9x16xf32>,
    %34 = vector.extract_strided_slice %0 {offsets = [0, 4, 0], sizes = [8, 1, 16], strides = [1, 1, 1]} : vector<8x9x16xf32> to vector<8x1x16xf32>
    %35 = vector.broadcast %34 : vector<8x1x16xf32> to vector<8x9x16xf32>
    %36 = arith.mulf %0, %35 : vector<8x9x16xf32>
    %37 = vector.extract_strided_slice %1 {offsets = [36, 0], sizes = [9, 1], strides = [1, 1]} : vector<81x1xf32> to vector<9x1xf32>
    %38 = vector.shape_cast %37 : vector<9x1xf32> to vector<1x9x1xf32>
    %39 = vector.broadcast %38 : vector<1x9x1xf32> to vector<8x9x16xf32>
    %40 = arith.mulf %36, %39 : vector<8x9x16xf32>
    %c0_13 = arith.constant 0 : index
    %c36 = arith.constant 36 : index
    %c0_14 = arith.constant 0 : index
    %41 = vector.load %arg4[%c0_13, %c36, %c0_14] : memref<8x81x16xf32, #tpu.memory_space<vmem>>, vector<8x9x16xf32>
    tpu.vector_store %arg4[%c0_13, %c36, %c0_14], %40 {strides = array<i32>} : memref<8x81x16xf32, #tpu.memory_space<vmem>>, vector<8x9x16xf32>,
    %42 = vector.extract_strided_slice %0 {offsets = [0, 5, 0], sizes = [8, 1, 16], strides = [1, 1, 1]} : vector<8x9x16xf32> to vector<8x1x16xf32>
    %43 = vector.broadcast %42 : vector<8x1x16xf32> to vector<8x9x16xf32>
    %44 = arith.mulf %0, %43 : vector<8x9x16xf32>
    %45 = vector.extract_strided_slice %1 {offsets = [45, 0], sizes = [9, 1], strides = [1, 1]} : vector<81x1xf32> to vector<9x1xf32>
    %46 = vector.shape_cast %45 : vector<9x1xf32> to vector<1x9x1xf32>
    %47 = vector.broadcast %46 : vector<1x9x1xf32> to vector<8x9x16xf32>
    %48 = arith.mulf %44, %47 : vector<8x9x16xf32>
    %c0_15 = arith.constant 0 : index
    %c45 = arith.constant 45 : index
    %c0_16 = arith.constant 0 : index
    %49 = vector.load %arg4[%c0_15, %c45, %c0_16] : memref<8x81x16xf32, #tpu.memory_space<vmem>>, vector<8x9x16xf32>
    tpu.vector_store %arg4[%c0_15, %c45, %c0_16], %48 {strides = array<i32>} : memref<8x81x16xf32, #tpu.memory_space<vmem>>, vector<8x9x16xf32>,
    %50 = vector.extract_strided_slice %0 {offsets = [0, 6, 0], sizes = [8, 1, 16], strides = [1, 1, 1]} : vector<8x9x16xf32> to vector<8x1x16xf32>
    %51 = vector.broadcast %50 : vector<8x1x16xf32> to vector<8x9x16xf32>
    %52 = arith.mulf %0, %51 : vector<8x9x16xf32>
    %53 = vector.extract_strided_slice %1 {offsets = [54, 0], sizes = [9, 1], strides = [1, 1]} : vector<81x1xf32> to vector<9x1xf32>
    %54 = vector.shape_cast %53 : vector<9x1xf32> to vector<1x9x1xf32>
    %55 = vector.broadcast %54 : vector<1x9x1xf32> to vector<8x9x16xf32>
    %56 = arith.mulf %52, %55 : vector<8x9x16xf32>
    %c0_17 = arith.constant 0 : index
    %c54 = arith.constant 54 : index
    %c0_18 = arith.constant 0 : index
    %57 = vector.load %arg4[%c0_17, %c54, %c0_18] : memref<8x81x16xf32, #tpu.memory_space<vmem>>, vector<8x9x16xf32>
    tpu.vector_store %arg4[%c0_17, %c54, %c0_18], %56 {strides = array<i32>} : memref<8x81x16xf32, #tpu.memory_space<vmem>>, vector<8x9x16xf32>,
    %58 = vector.extract_strided_slice %0 {offsets = [0, 7, 0], sizes = [8, 1, 16], strides = [1, 1, 1]} : vector<8x9x16xf32> to vector<8x1x16xf32>
    %59 = vector.broadcast %58 : vector<8x1x16xf32> to vector<8x9x16xf32>
    %60 = arith.mulf %0, %59 : vector<8x9x16xf32>
    %61 = vector.extract_strided_slice %1 {offsets = [63, 0], sizes = [9, 1], strides = [1, 1]} : vector<81x1xf32> to vector<9x1xf32>
    %62 = vector.shape_cast %61 : vector<9x1xf32> to vector<1x9x1xf32>
    %63 = vector.broadcast %62 : vector<1x9x1xf32> to vector<8x9x16xf32>
    %64 = arith.mulf %60, %63 : vector<8x9x16xf32>
    %c0_19 = arith.constant 0 : index
    %c63 = arith.constant 63 : index
    %c0_20 = arith.constant 0 : index
    %65 = vector.load %arg4[%c0_19, %c63, %c0_20] : memref<8x81x16xf32, #tpu.memory_space<vmem>>, vector<8x9x16xf32>
    tpu.vector_store %arg4[%c0_19, %c63, %c0_20], %64 {strides = array<i32>} : memref<8x81x16xf32, #tpu.memory_space<vmem>>, vector<8x9x16xf32>,
    %66 = vector.extract_strided_slice %0 {offsets = [0, 8, 0], sizes = [8, 1, 16], strides = [1, 1, 1]} : vector<8x9x16xf32> to vector<8x1x16xf32>
    %67 = vector.broadcast %66 : vector<8x1x16xf32> to vector<8x9x16xf32>
    %68 = arith.mulf %0, %67 : vector<8x9x16xf32>
    %69 = vector.extract_strided_slice %1 {offsets = [72, 0], sizes = [9, 1], strides = [1, 1]} : vector<81x1xf32> to vector<9x1xf32>
    %70 = vector.shape_cast %69 : vector<9x1xf32> to vector<1x9x1xf32>
    %71 = vector.broadcast %70 : vector<1x9x1xf32> to vector<8x9x16xf32>
    %72 = arith.mulf %68, %71 : vector<8x9x16xf32>
    %c0_21 = arith.constant 0 : index
    %c72 = arith.constant 72 : index
    %c0_22 = arith.constant 0 : index
    %73 = vector.load %arg4[%c0_21, %c72, %c0_22] : memref<8x81x16xf32, #tpu.memory_space<vmem>>, vector<8x9x16xf32>
    tpu.vector_store %arg4[%c0_21, %c72, %c0_22], %72 {strides = array<i32>} : memref<8x81x16xf32, #tpu.memory_space<vmem>>, vector<8x9x16xf32>,
    return
  }
  func.func @transform_0(%arg0: i32, %arg1: i32) -> (i32, i32, i32) {
    %c0_i32 = arith.constant 0 : i32
    %c0_i32_0 = arith.constant 0 : i32
    return %arg0, %c0_i32, %arg1 : i32, i32, i32
  }
  func.func @transform_1(%arg0: i32, %arg1: i32) -> (i32, i32) {
    %c0_i32 = arith.constant 0 : i32
    %c0_i32_0 = arith.constant 0 : i32
    %c0_i32_1 = arith.constant 0 : i32
    return %c0_i32, %c0_i32_0 : i32, i32
  }
  func.func @transform_2(%arg0: i32, %arg1: i32) -> (i32, i32, i32) {
    %c0_i32 = arith.constant 0 : i32
    %c0_i32_0 = arith.constant 0 : i32
    return %arg0, %c0_i32, %arg1 : i32, i32, i32
  }
}

</mosaic_0001>

<llo_original>
// kernel: tpu_custom_call.1
$region0: #{tpu_custom_call.1}
  #allocation0 [shape = 'u32[]', space=smem, size = 0x4, offset = 0x4, fixed_abs, tag = 'smem constant byte address 0x4 - core index']
  #allocation1 [shape = 'u32[144,128]{1,0:T(1,128)}', space=vmem, size = 0x12000, scoped, tag = 'internal scratch']
  %s0 = inlined_call_operand.vmem [shape: f32[8,9,16], index: 0, kind: input, shape index: {}]
  %s1 = inlined_call_operand.vmem [shape: f32[81,1], index: 1, kind: input, shape index: {}]
  %s2 = inlined_call_operand.vmem [shape: f32[8,81,16], index: 2, kind: output, shape index: {}]
  %s3 = sld [smem:[#allocation0]]
  $region18: #{tpu_custom_call.1} parent=0
    _
  %s5 = ssub.s32 1, %s3
  %s6 = scalar_select 0, %s5, %s3
  // Predicated region
  $region2: #{tpu_custom_call.1} parent=0 // pred_check
    _
  $region3: #{tpu_custom_call.1} parent=0 // pred_check_branch
    %8 = sbr.rel (0) target = $region5
  $region4: #{tpu_custom_call.1} parent=0 // pred_region
    _
  $region5: #{tpu_custom_call.1} parent=0 // pred_fallthru
    _
  // Predicated region
  $region6: #{tpu_custom_call.1} parent=0 // pred_check
    _
  $region7: #{tpu_custom_call.1} parent=0 // pred_check_branch
    %10 = sbr.rel (0) target = $region9
  $region8: #{tpu_custom_call.1} parent=0 // pred_region
    _
  $region9: #{tpu_custom_call.1} parent=0 // pred_fallthru
    _
  %v11 = vld [vmem:[%s0] sm:$0xff]
  %v12 = vld [vmem:[%s0 + $0x8] sm:$0x1]
  %v13 = vld [vmem:[%s0 + $0x10] sm:$0xff]
  %v14 = vld [vmem:[%s0 + $0x18] sm:$0x1]
  %v15 = vld [vmem:[%s0 + $0x20] sm:$0xff]
  %v16 = vld [vmem:[%s0 + $0x28] sm:$0x1]
  %v17 = vld [vmem:[%s0 + $0x30] sm:$0xff]
  %v18 = vld [vmem:[%s0 + $0x38] sm:$0x1]
  %v19 = vld [vmem:[%s0 + $0x40] sm:$0xff]
  %v20 = vld [vmem:[%s0 + $0x48] sm:$0x1]
  %v21 = vld [vmem:[%s0 + $0x50] sm:$0xff]
  %v22 = vld [vmem:[%s0 + $0x58] sm:$0x1]
  %v23 = vld [vmem:[%s0 + $0x60] sm:$0xff]
  %v24 = vld [vmem:[%s0 + $0x68] sm:$0x1]
  %v25 = vld [vmem:[%s0 + $0x70] sm:$0xff]
  %v26 = vld [vmem:[%s0 + $0x78] sm:$0x1]
  %v27 = vld [vmem:[%s1] sm:$0xff]
  %v28 = vld [vmem:[%s1 + $0x8] sm:$0xff]
  %v29 = vld [vmem:[%s1 + $0x10] sm:$0xff]
  %v30 = vld [vmem:[%s1 + $0x18] sm:$0xff]
  %v31 = vld [vmem:[%s1 + $0x20] sm:$0xff]
  %v32 = vld [vmem:[%s1 + $0x28] sm:$0xff]
  %v33 = vld [vmem:[%s1 + $0x30] sm:$0xff]
  %v34 = vld [vmem:[%s1 + $0x38] sm:$0xff]
  %v35 = vld [vmem:[%s1 + $0x40] sm:$0xff]
  %v36 = vld [vmem:[%s1 + $0x48] sm:$0xff]
  %v37 = vld [vmem:[%s1 + $0x50] sm:$0x1]
  %v38 = vlaneseq
  %v39 = vshrl.u32 %v38, 7
  %v40 = vsub.s32 0, %v39
  %v41 = vrot.slane %v11, %v40
  %v42 = vlaneseq
  %v43 = vshrl.u32 %v42, 7
  %v44 = vsub.s32 0, %v43
  %v45 = vrot.slane %v13, %v44
  %v46 = vlaneseq
  %v47 = vshrl.u32 %v46, 7
  %v48 = vsub.s32 0, %v47
  %v49 = vrot.slane %v15, %v48
  %v50 = vlaneseq
  %v51 = vshrl.u32 %v50, 7
  %v52 = vsub.s32 0, %v51
  %v53 = vrot.slane %v17, %v52
  %v54 = vlaneseq
  %v55 = vshrl.u32 %v54, 7
  %v56 = vsub.s32 0, %v55
  %v57 = vrot.slane %v19, %v56
  %v58 = vlaneseq
  %v59 = vshrl.u32 %v58, 7
  %v60 = vsub.s32 0, %v59
  %v61 = vrot.slane %v21, %v60
  %v62 = vlaneseq
  %v63 = vshrl.u32 %v62, 7
  %v64 = vsub.s32 0, %v63
  %v65 = vrot.slane %v23, %v64
  %v66 = vlaneseq
  %v67 = vshrl.u32 %v66, 7
  %v68 = vsub.s32 0, %v67
  %v69 = vrot.slane %v25, %v68
  %v70 = vmul.f32 %v11, %v41
  %v71 = vmul.f32 %v12, %v41
  %v72 = vmul.f32 %v13, %v45
  %v73 = vmul.f32 %v14, %v45
  %v74 = vmul.f32 %v15, %v49
  %v75 = vmul.f32 %v16, %v49
  %v76 = vmul.f32 %v17, %v53
  %v77 = vmul.f32 %v18, %v53
  %v78 = vmul.f32 %v19, %v57
  %v79 = vmul.f32 %v20, %v57
  %v80 = vmul.f32 %v21, %v61
  %v81 = vmul.f32 %v22, %v61
  %v82 = vmul.f32 %v23, %v65
  %v83 = vmul.f32 %v24, %v65
  %v84 = vmul.f32 %v25, %v69
  %v85 = vmul.f32 %v26, %v69
  %87 = vset.pattern.permute.xlu0 0
  %88 = vperm.xlu0 %87, %v27
  %v89 = vpop.permute.xlu0 %88
  %92 = vset.pattern.permute.xlu0 0
  %93 = vperm.xlu0 %92, %v28
  %v94 = vpop.permute.xlu0 %93
  %v96 = vmul.f32 %v70, %v89
  %v97 = vmul.f32 %v71, %v94
  %v98 = vmul.f32 %v72, %v89
  %v99 = vmul.f32 %v73, %v94
  %v100 = vmul.f32 %v74, %v89
  %v101 = vmul.f32 %v75, %v94
  %v102 = vmul.f32 %v76, %v89
  %v103 = vmul.f32 %v77, %v94
  %v104 = vmul.f32 %v78, %v89
  %v105 = vmul.f32 %v79, %v94
  %v106 = vmul.f32 %v80, %v89
  %v107 = vmul.f32 %v81, %v94
  %v108 = vmul.f32 %v82, %v89
  %v109 = vmul.f32 %v83, %v94
  %v110 = vmul.f32 %v84, %v89
  %v111 = vmul.f32 %v85, %v94
  %vm112 = vcmask 130048
  %113 = vst.msk [vmem:[%s2] sm:$0xff] %vm112, %v96
  %vm114 = vcmask 122880
  %115 = vst.msk [vmem:[%s2 + $0x8] sm:$0x1] %vm114, %v97
  %116 = vst.msk [vmem:[%s2 + $0x58] sm:$0xff] %vm112, %v98
  %117 = vst.msk [vmem:[%s2 + $0x60] sm:$0x1] %vm114, %v99
  %118 = vst.msk [vmem:[%s2 + $0xb0] sm:$0xff] %vm112, %v100
  %119 = vst.msk [vmem:[%s2 + $0xb8] sm:$0x1] %vm114, %v101
  %120 = vst.msk [vmem:[%s2 + $0x108] sm:$0xff] %vm112, %v102
  %121 = vst.msk [vmem:[%s2 + $0x110] sm:$0x1] %vm114, %v103
  %122 = vst.msk [vmem:[%s2 + $0x160] sm:$0xff] %vm112, %v104
  %123 = vst.msk [vmem:[%s2 + $0x168] sm:$0x1] %vm114, %v105
  %124 = vst.msk [vmem:[%s2 + $0x1b8] sm:$0xff] %vm112, %v106
  %125 = vst.msk [vmem:[%s2 + $0x1c0] sm:$0x1] %vm114, %v107
  %126 = vst.msk [vmem:[%s2 + $0x210] sm:$0xff] %vm112, %v108
  %127 = vst.msk [vmem:[%s2 + $0x218] sm:$0x1] %vm114, %v109
  %128 = vst.msk [vmem:[%s2 + $0x268] sm:$0xff] %vm112, %v110
  %129 = vst.msk [vmem:[%s2 + $0x270] sm:$0x1] %vm114, %v111
  %v130 = vlaneseq
  %v131 = vshrl.u32 %v130, 7
  %v132 = vsub.s32 1, %v131
  %v133 = vrot.slane %v11, %v132
  %v134 = vlaneseq
  %v135 = vshrl.u32 %v134, 7
  %v136 = vsub.s32 1, %v135
  %v137 = vrot.slane %v13, %v136
  %v138 = vlaneseq
  %v139 = vshrl.u32 %v138, 7
  %v140 = vsub.s32 1, %v139
  %v141 = vrot.slane %v15, %v140
  %v142 = vlaneseq
  %v143 = vshrl.u32 %v142, 7
  %v144 = vsub.s32 1, %v143
  %v145 = vrot.slane %v17, %v144
  %v146 = vlaneseq
  %v147 = vshrl.u32 %v146, 7
  %v148 = vsub.s32 1, %v147
  %v149 = vrot.slane %v19, %v148
  %v150 = vlaneseq
  %v151 = vshrl.u32 %v150, 7
  %v152 = vsub.s32 1, %v151
  %v153 = vrot.slane %v21, %v152
  %v154 = vlaneseq
  %v155 = vshrl.u32 %v154, 7
  %v156 = vsub.s32 1, %v155
  %v157 = vrot.slane %v23, %v156
  %v158 = vlaneseq
  %v159 = vshrl.u32 %v158, 7
  %v160 = vsub.s32 1, %v159
  %v161 = vrot.slane %v25, %v160
  %v162 = vmul.f32 %v11, %v133
  %v163 = vmul.f32 %v12, %v133
  %v164 = vmul.f32 %v13, %v137
  %v165 = vmul.f32 %v14, %v137
  %v166 = vmul.f32 %v15, %v141
  %v167 = vmul.f32 %v16, %v141
  %v168 = vmul.f32 %v17, %v145
  %v169 = vmul.f32 %v18, %v145
  %v170 = vmul.f32 %v19, %v149
  %v171 = vmul.f32 %v20, %v149
  %v172 = vmul.f32 %v21, %v153
  %v173 = vmul.f32 %v22, %v153
  %v174 = vmul.f32 %v23, %v157
  %v175 = vmul.f32 %v24, %v157
  %v176 = vmul.f32 %v25, %v161
  %v177 = vmul.f32 %v26, %v161
  %179 = vset.pattern.permute.xlu0 0
  %180 = vperm.xlu0 %179, %v29
  %v181 = vpop.permute.xlu0 %180
  %vm182 = vcmask 1046528
  %v183 = vrot.slane %v94, 1
  %v184 = vrot.slane %v181, 1
  %v185 = vsel %vm182, %v183, %v184
  %v188 = vmul.f32 %v162, %v185
  %v189 = vmul.f32 %v163, %v184
  %v190 = vmul.f32 %v164, %v185
  %v191 = vmul.f32 %v165, %v184
  %v192 = vmul.f32 %v166, %v185
  %v193 = vmul.f32 %v167, %v184
  %v194 = vmul.f32 %v168, %v185
  %v195 = vmul.f32 %v169, %v184
  %v196 = vmul.f32 %v170, %v185
  %v197 = vmul.f32 %v171, %v184
  %v198 = vmul.f32 %v172, %v185
  %v199 = vmul.f32 %v173, %v184
  %v200 = vmul.f32 %v174, %v185
  %v201 = vmul.f32 %v175, %v184
  %v202 = vmul.f32 %v176, %v185
  %v203 = vmul.f32 %v177, %v184
  %204 = vst.msk [vmem:[%s2 + $0x9] sm:$0xff] %vm112, %v188
  %205 = vst.msk [vmem:[%s2 + $0x11] sm:$0x1] %vm114, %v189
  %206 = vst.msk [vmem:[%s2 + $0x61] sm:$0xff] %vm112, %v190
  %207 = vst.msk [vmem:[%s2 + $0x69] sm:$0x1] %vm114, %v191
  %208 = vst.msk [vmem:[%s2 + $0xb9] sm:$0xff] %vm112, %v192
  %209 = vst.msk [vmem:[%s2 + $0xc1] sm:$0x1] %vm114, %v193
  %210 = vst.msk [vmem:[%s2 + $0x111] sm:$0xff] %vm112, %v194
  %211 = vst.msk [vmem:[%s2 + $0x119] sm:$0x1] %vm114, %v195
  %212 = vst.msk [vmem:[%s2 + $0x169] sm:$0xff] %vm112, %v196
  %213 = vst.msk [vmem:[%s2 + $0x171] sm:$0x1] %vm114, %v197
  %214 = vst.msk [vmem:[%s2 + $0x1c1] sm:$0xff] %vm112, %v198
  %215 = vst.msk [vmem:[%s2 + $0x1c9] sm:$0x1] %vm114, %v199
  %216 = vst.msk [vmem:[%s2 + $0x219] sm:$0xff] %vm112, %v200
  %217 = vst.msk [vmem:[%s2 + $0x221] sm:$0x1] %vm114, %v201
  %218 = vst.msk [vmem:[%s2 + $0x271] sm:$0xff] %vm112, %v202
  %219 = vst.msk [vmem:[%s2 + $0x279] sm:$0x1] %vm114, %v203
  %v220 = vlaneseq
  %v221 = vshrl.u32 %v220, 7
  %v222 = vsub.s32 2, %v221
  %v223 = vrot.slane %v11, %v222
  %v224 = vlaneseq
  %v225 = vshrl.u32 %v224, 7
  %v226 = vsub.s32 2, %v225
  %v227 = vrot.slane %v13, %v226
  %v228 = vlaneseq
  %v229 = vshrl.u32 %v228, 7
  %v230 = vsub.s32 2, %v229
  %v231 = vrot.slane %v15, %v230
  %v232 = vlaneseq
  %v233 = vshrl.u32 %v232, 7
  %v234 = vsub.s32 2, %v233
  %v235 = vrot.slane %v17, %v234
  %v236 = vlaneseq
  %v237 = vshrl.u32 %v236, 7
  %v238 = vsub.s32 2, %v237
  %v239 = vrot.slane %v19, %v238
  %v240 = vlaneseq
  %v241 = vshrl.u32 %v240, 7
  %v242 = vsub.s32 2, %v241
  %v243 = vrot.slane %v21, %v242
  %v244 = vlaneseq
  %v245 = vshrl.u32 %v244, 7
  %v246 = vsub.s32 2, %v245
  %v247 = vrot.slane %v23, %v246
  %v248 = vlaneseq
  %v249 = vshrl.u32 %v248, 7
  %v250 = vsub.s32 2, %v249
  %v251 = vrot.slane %v25, %v250
  %v252 = vmul.f32 %v11, %v223
  %v253 = vmul.f32 %v12, %v223
  %v254 = vmul.f32 %v13, %v227
  %v255 = vmul.f32 %v14, %v227
  %v256 = vmul.f32 %v15, %v231
  %v257 = vmul.f32 %v16, %v231
  %v258 = vmul.f32 %v17, %v235
  %v259 = vmul.f32 %v18, %v235
  %v260 = vmul.f32 %v19, %v239
  %v261 = vmul.f32 %v20, %v239
  %v262 = vmul.f32 %v21, %v243
  %v263 = vmul.f32 %v22, %v243
  %v264 = vmul.f32 %v23, %v247
  %v265 = vmul.f32 %v24, %v247
  %v266 = vmul.f32 %v25, %v251
  %v267 = vmul.f32 %v26, %v251
  %269 = vset.pattern.permute.xlu0 0
  %270 = vperm.xlu0 %269, %v30
  %v271 = vpop.permute.xlu0 %270
  %vm272 = vcmask 1045504
  %v273 = vrot.slane %v181, 2
  %v274 = vrot.slane %v271, 2
  %v275 = vsel %vm272, %v273, %v274
  %v278 = vmul.f32 %v252, %v275
  %v279 = vmul.f32 %v253, %v274
  %v280 = vmul.f32 %v254, %v275
  %v281 = vmul.f32 %v255, %v274
  %v282 = vmul.f32 %v256, %v275
  %v283 = vmul.f32 %v257, %v274
  %v284 = vmul.f32 %v258, %v275
  %v285 = vmul.f32 %v259, %v274
  %v286 = vmul.f32 %v260, %v275
  %v287 = vmul.f32 %v261, %v274
  %v288 = vmul.f32 %v262, %v275
  %v289 = vmul.f32 %v263, %v274
  %v290 = vmul.f32 %v264, %v275
  %v291 = vmul.f32 %v265, %v274
  %v292 = vmul.f32 %v266, %v275
  %v293 = vmul.f32 %v267, %v274
  %294 = vst.msk [vmem:[%s2 + $0x12] sm:$0xff] %vm112, %v278
  %295 = vst.msk [vmem:[%s2 + $0x1a] sm:$0x1] %vm114, %v279
  %296 = vst.msk [vmem:[%s2 + $0x6a] sm:$0xff] %vm112, %v280
  %297 = vst.msk [vmem:[%s2 + $0x72] sm:$0x1] %vm114, %v281
  %298 = vst.msk [vmem:[%s2 + $0xc2] sm:$0xff] %vm112, %v282
  %299 = vst.msk [vmem:[%s2 + $0xca] sm:$0x1] %vm114, %v283
  %300 = vst.msk [vmem:[%s2 + $0x11a] sm:$0xff] %vm112, %v284
  %301 = vst.msk [vmem:[%s2 + $0x122] sm:$0x1] %vm114, %v285
  %302 = vst.msk [vmem:[%s2 + $0x172] sm:$0xff] %vm112, %v286
  %303 = vst.msk [vmem:[%s2 + $0x17a] sm:$0x1] %vm114, %v287
  %304 = vst.msk [vmem:[%s2 + $0x1ca] sm:$0xff] %vm112, %v288
  %305 = vst.msk [vmem:[%s2 + $0x1d2] sm:$0x1] %vm114, %v289
  %306 = vst.msk [vmem:[%s2 + $0x222] sm:$0xff] %vm112, %v290
  %307 = vst.msk [vmem:[%s2 + $0x22a] sm:$0x1] %vm114, %v291
  %308 = vst.msk [vmem:[%s2 + $0x27a] sm:$0xff] %vm112, %v292
  %309 = vst.msk [vmem:[%s2 + $0x282] sm:$0x1] %vm114, %v293
  %v310 = vlaneseq
  %v311 = vshrl.u32 %v310, 7
  %v312 = vsub.s32 3, %v311
  %v313 = vrot.slane %v11, %v312
  %v314 = vlaneseq
  %v315 = vshrl.u32 %v314, 7
  %v316 = vsub.s32 3, %v315
  %v317 = vrot.slane %v13, %v316
  %v318 = vlaneseq
  %v319 = vshrl.u32 %v318, 7
  %v320 = vsub.s32 3, %v319
  %v321 = vrot.slane %v15, %v320
  %v322 = vlaneseq
  %v323 = vshrl.u32 %v322, 7
  %v324 = vsub.s32 3, %v323
  %v325 = vrot.slane %v17, %v324
  %v326 = vlaneseq
  %v327 = vshrl.u32 %v326, 7
  %v328 = vsub.s32 3, %v327
  %v329 = vrot.slane %v19, %v328
  %v330 = vlaneseq
  %v331 = vshrl.u32 %v330, 7
  %v332 = vsub.s32 3, %v331
  %v333 = vrot.slane %v21, %v332
  %v334 = vlaneseq
  %v335 = vshrl.u32 %v334, 7
  %v336 = vsub.s32 3, %v335
  %v337 = vrot.slane %v23, %v336
  %v338 = vlaneseq
  %v339 = vshrl.u32 %v338, 7
  %v340 = vsub.s32 3, %v339
  %v341 = vrot.slane %v25, %v340
  %v342 = vmul.f32 %v11, %v313
  %v343 = vmul.f32 %v12, %v313
  %v344 = vmul.f32 %v13, %v317
  %v345 = vmul.f32 %v14, %v317
  %v346 = vmul.f32 %v15, %v321
  %v347 = vmul.f32 %v16, %v321
  %v348 = vmul.f32 %v17, %v325
  %v349 = vmul.f32 %v18, %v325
  %v350 = vmul.f32 %v19, %v329
  %v351 = vmul.f32 %v20, %v329
  %v352 = vmul.f32 %v21, %v333
  %v353 = vmul.f32 %v22, %v333
  %v354 = vmul.f32 %v23, %v337
  %v355 = vmul.f32 %v24, %v337
  %v356 = vmul.f32 %v25, %v341
  %v357 = vmul.f32 %v26, %v341
  %359 = vset.pattern.permute.xlu0 0
  %360 = vperm.xlu0 %359, %v31
  %v361 = vpop.permute.xlu0 %360
  %vm362 = vcmask 1044480
  %v363 = vrot.slane %v271, 3
  %v364 = vrot.slane %v361, 3
  %v365 = vsel %vm362, %v363, %v364
  %v368 = vmul.f32 %v342, %v365
  %v369 = vmul.f32 %v343, %v364
  %v370 = vmul.f32 %v344, %v365
  %v371 = vmul.f32 %v345, %v364
  %v372 = vmul.f32 %v346, %v365
  %v373 = vmul.f32 %v347, %v364
  %v374 = vmul.f32 %v348, %v365
  %v375 = vmul.f32 %v349, %v364
  %v376 = vmul.f32 %v350, %v365
  %v377 = vmul.f32 %v351, %v364
  %v378 = vmul.f32 %v352, %v365
  %v379 = vmul.f32 %v353, %v364
  %v380 = vmul.f32 %v354, %v365
  %v381 = vmul.f32 %v355, %v364
  %v382 = vmul.f32 %v356, %v365
  %v383 = vmul.f32 %v357, %v364
  %384 = vst.msk [vmem:[%s2 + $0x1b] sm:$0xff] %vm112, %v368
  %385 = vst.msk [vmem:[%s2 + $0x23] sm:$0x1] %vm114, %v369
  %386 = vst.msk [vmem:[%s2 + $0x73] sm:$0xff] %vm112, %v370
  %387 = vst.msk [vmem:[%s2 + $0x7b] sm:$0x1] %vm114, %v371
  %388 = vst.msk [vmem:[%s2 + $0xcb] sm:$0xff] %vm112, %v372
  %389 = vst.msk [vmem:[%s2 + $0xd3] sm:$0x1] %vm114, %v373
  %390 = vst.msk [vmem:[%s2 + $0x123] sm:$0xff] %vm112, %v374
  %391 = vst.msk [vmem:[%s2 + $0x12b] sm:$0x1] %vm114, %v375
  %392 = vst.msk [vmem:[%s2 + $0x17b] sm:$0xff] %vm112, %v376
  %393 = vst.msk [vmem:[%s2 + $0x183] sm:$0x1] %vm114, %v377
  %394 = vst.msk [vmem:[%s2 + $0x1d3] sm:$0xff] %vm112, %v378
  %395 = vst.msk [vmem:[%s2 + $0x1db] sm:$0x1] %vm114, %v379
  %396 = vst.msk [vmem:[%s2 + $0x22b] sm:$0xff] %vm112, %v380
  %397 = vst.msk [vmem:[%s2 + $0x233] sm:$0x1] %vm114, %v381
  %398 = vst.msk [vmem:[%s2 + $0x283] sm:$0xff] %vm112, %v382
  %399 = vst.msk [vmem:[%s2 + $0x28b] sm:$0x1] %vm114, %v383
  %v400 = vlaneseq
  %v401 = vshrl.u32 %v400, 7
  %v402 = vsub.s32 4, %v401
  %v403 = vrot.slane %v11, %v402
  %v404 = vlaneseq
  %v405 = vshrl.u32 %v404, 7
  %v406 = vsub.s32 4, %v405
  %v407 = vrot.slane %v13, %v406
  %v408 = vlaneseq
  %v409 = vshrl.u32 %v408, 7
  %v410 = vsub.s32 4, %v409
  %v411 = vrot.slane %v15, %v410
  %v412 = vlaneseq
  %v413 = vshrl.u32 %v412, 7
  %v414 = vsub.s32 4, %v413
  %v415 = vrot.slane %v17, %v414
  %v416 = vlaneseq
  %v417 = vshrl.u32 %v416, 7
  %v418 = vsub.s32 4, %v417
  %v419 = vrot.slane %v19, %v418
  %v420 = vlaneseq
  %v421 = vshrl.u32 %v420, 7
  %v422 = vsub.s32 4, %v421
  %v423 = vrot.slane %v21, %v422
  %v424 = vlaneseq
  %v425 = vshrl.u32 %v424, 7
  %v426 = vsub.s32 4, %v425
  %v427 = vrot.slane %v23, %v426
  %v428 = vlaneseq
  %v429 = vshrl.u32 %v428, 7
  %v430 = vsub.s32 4, %v429
  %v431 = vrot.slane %v25, %v430
  %v432 = vmul.f32 %v11, %v403
  %v433 = vmul.f32 %v12, %v403
  %v434 = vmul.f32 %v13, %v407
  %v435 = vmul.f32 %v14, %v407
  %v436 = vmul.f32 %v15, %v411
  %v437 = vmul.f32 %v16, %v411
  %v438 = vmul.f32 %v17, %v415
  %v439 = vmul.f32 %v18, %v415
  %v440 = vmul.f32 %v19, %v419
  %v441 = vmul.f32 %v20, %v419
  %v442 = vmul.f32 %v21, %v423
  %v443 = vmul.f32 %v22, %v423
  %v444 = vmul.f32 %v23, %v427
  %v445 = vmul.f32 %v24, %v427
  %v446 = vmul.f32 %v25, %v431
  %v447 = vmul.f32 %v26, %v431
  %449 = vset.pattern.permute.xlu0 0
  %450 = vperm.xlu0 %449, %v32
  %v451 = vpop.permute.xlu0 %450
  %vm452 = vcmask 1043456
  %v453 = vrot.slane %v361, 4
  %v454 = vrot.slane %v451, 4
  %v455 = vsel %vm452, %v453, %v454
  %v458 = vmul.f32 %v432, %v455
  %v459 = vmul.f32 %v433, %v454
  %v460 = vmul.f32 %v434, %v455
  %v461 = vmul.f32 %v435, %v454
  %v462 = vmul.f32 %v436, %v455
  %v463 = vmul.f32 %v437, %v454
  %v464 = vmul.f32 %v438, %v455
  %v465 = vmul.f32 %v439, %v454
  %v466 = vmul.f32 %v440, %v455
  %v467 = vmul.f32 %v441, %v454
  %v468 = vmul.f32 %v442, %v455
  %v469 = vmul.f32 %v443, %v454
  %v470 = vmul.f32 %v444, %v455
  %v471 = vmul.f32 %v445, %v454
  %v472 = vmul.f32 %v446, %v455
  %v473 = vmul.f32 %v447, %v454
  %474 = vst.msk [vmem:[%s2 + $0x24] sm:$0xff] %vm112, %v458
  %475 = vst.msk [vmem:[%s2 + $0x2c] sm:$0x1] %vm114, %v459
  %476 = vst.msk [vmem:[%s2 + $0x7c] sm:$0xff] %vm112, %v460
  %477 = vst.msk [vmem:[%s2 + $0x84] sm:$0x1] %vm114, %v461
  %478 = vst.msk [vmem:[%s2 + $0xd4] sm:$0xff] %vm112, %v462
  %479 = vst.msk [vmem:[%s2 + $0xdc] sm:$0x1] %vm114, %v463
  %480 = vst.msk [vmem:[%s2 + $0x12c] sm:$0xff] %vm112, %v464
  %481 = vst.msk [vmem:[%s2 + $0x134] sm:$0x1] %vm114, %v465
  %482 = vst.msk [vmem:[%s2 + $0x184] sm:$0xff] %vm112, %v466
  %483 = vst.msk [vmem:[%s2 + $0x18c] sm:$0x1] %vm114, %v467
  %484 = vst.msk [vmem:[%s2 + $0x1dc] sm:$0xff] %vm112, %v468
  %485 = vst.msk [vmem:[%s2 + $0x1e4] sm:$0x1] %vm114, %v469
  %486 = vst.msk [vmem:[%s2 + $0x234] sm:$0xff] %vm112, %v470
  %487 = vst.msk [vmem:[%s2 + $0x23c] sm:$0x1] %vm114, %v471
  %488 = vst.msk [vmem:[%s2 + $0x28c] sm:$0xff] %vm112, %v472
  %489 = vst.msk [vmem:[%s2 + $0x294] sm:$0x1] %vm114, %v473
  %v490 = vlaneseq
  %v491 = vshrl.u32 %v490, 7
  %v492 = vsub.s32 5, %v491
  %v493 = vrot.slane %v11, %v492
  %v494 = vlaneseq
  %v495 = vshrl.u32 %v494, 7
  %v496 = vsub.s32 5, %v495
  %v497 = vrot.slane %v13, %v496
  %v498 = vlaneseq
  %v499 = vshrl.u32 %v498, 7
  %v500 = vsub.s32 5, %v499
  %v501 = vrot.slane %v15, %v500
  %v502 = vlaneseq
  %v503 = vshrl.u32 %v502, 7
  %v504 = vsub.s32 5, %v503
  %v505 = vrot.slane %v17, %v504
  %v506 = vlaneseq
  %v507 = vshrl.u32 %v506, 7
  %v508 = vsub.s32 5, %v507
  %v509 = vrot.slane %v19, %v508
  %v510 = vlaneseq
  %v511 = vshrl.u32 %v510, 7
  %v512 = vsub.s32 5, %v511
  %v513 = vrot.slane %v21, %v512
  %v514 = vlaneseq
  %v515 = vshrl.u32 %v514, 7
  %v516 = vsub.s32 5, %v515
  %v517 = vrot.slane %v23, %v516
  %v518 = vlaneseq
  %v519 = vshrl.u32 %v518, 7
  %v520 = vsub.s32 5, %v519
  %v521 = vrot.slane %v25, %v520
  %v522 = vmul.f32 %v11, %v493
  %v523 = vmul.f32 %v12, %v493
  %v524 = vmul.f32 %v13, %v497
  %v525 = vmul.f32 %v14, %v497
  %v526 = vmul.f32 %v15, %v501
  %v527 = vmul.f32 %v16, %v501
  %v528 = vmul.f32 %v17, %v505
  %v529 = vmul.f32 %v18, %v505
  %v530 = vmul.f32 %v19, %v509
  %v531 = vmul.f32 %v20, %v509
  %v532 = vmul.f32 %v21, %v513
  %v533 = vmul.f32 %v22, %v513
  %v534 = vmul.f32 %v23, %v517
  %v535 = vmul.f32 %v24, %v517
  %v536 = vmul.f32 %v25, %v521
  %v537 = vmul.f32 %v26, %v521
  %539 = vset.pattern.permute.xlu0 0
  %540 = vperm.xlu0 %539, %v33
  %v541 = vpop.permute.xlu0 %540
  %vm542 = vcmask 1042432
  %v543 = vrot.slane %v451, 5
  %v544 = vrot.slane %v541, 5
  %v545 = vsel %vm542, %v543, %v544
  %v548 = vmul.f32 %v522, %v545
  %v549 = vmul.f32 %v523, %v544
  %v550 = vmul.f32 %v524, %v545
  %v551 = vmul.f32 %v525, %v544
  %v552 = vmul.f32 %v526, %v545
  %v553 = vmul.f32 %v527, %v544
  %v554 = vmul.f32 %v528, %v545
  %v555 = vmul.f32 %v529, %v544
  %v556 = vmul.f32 %v530, %v545
  %v557 = vmul.f32 %v531, %v544
  %v558 = vmul.f32 %v532, %v545
  %v559 = vmul.f32 %v533, %v544
  %v560 = vmul.f32 %v534, %v545
  %v561 = vmul.f32 %v535, %v544
  %v562 = vmul.f32 %v536, %v545
  %v563 = vmul.f32 %v537, %v544
  %564 = vst.msk [vmem:[%s2 + $0x2d] sm:$0xff] %vm112, %v548
  %565 = vst.msk [vmem:[%s2 + $0x35] sm:$0x1] %vm114, %v549
  %566 = vst.msk [vmem:[%s2 + $0x85] sm:$0xff] %vm112, %v550
  %567 = vst.msk [vmem:[%s2 + $0x8d] sm:$0x1] %vm114, %v551
  %568 = vst.msk [vmem:[%s2 + $0xdd] sm:$0xff] %vm112, %v552
  %569 = vst.msk [vmem:[%s2 + $0xe5] sm:$0x1] %vm114, %v553
  %570 = vst.msk [vmem:[%s2 + $0x135] sm:$0xff] %vm112, %v554
  %571 = vst.msk [vmem:[%s2 + $0x13d] sm:$0x1] %vm114, %v555
  %572 = vst.msk [vmem:[%s2 + $0x18d] sm:$0xff] %vm112, %v556
  %573 = vst.msk [vmem:[%s2 + $0x195] sm:$0x1] %vm114, %v557
  %574 = vst.msk [vmem:[%s2 + $0x1e5] sm:$0xff] %vm112, %v558
  %575 = vst.msk [vmem:[%s2 + $0x1ed] sm:$0x1] %vm114, %v559
  %576 = vst.msk [vmem:[%s2 + $0x23d] sm:$0xff] %vm112, %v560
  %577 = vst.msk [vmem:[%s2 + $0x245] sm:$0x1] %vm114, %v561
  %578 = vst.msk [vmem:[%s2 + $0x295] sm:$0xff] %vm112, %v562
  %579 = vst.msk [vmem:[%s2 + $0x29d] sm:$0x1] %vm114, %v563
  %v580 = vlaneseq
  %v581 = vshrl.u32 %v580, 7
  %v582 = vsub.s32 6, %v581
  %v583 = vrot.slane %v11, %v582
  %v584 = vlaneseq
  %v585 = vshrl.u32 %v584, 7
  %v586 = vsub.s32 6, %v585
  %v587 = vrot.slane %v13, %v586
  %v588 = vlaneseq
  %v589 = vshrl.u32 %v588, 7
  %v590 = vsub.s32 6, %v589
  %v591 = vrot.slane %v15, %v590
  %v592 = vlaneseq
  %v593 = vshrl.u32 %v592, 7
  %v594 = vsub.s32 6, %v593
  %v595 = vrot.slane %v17, %v594
  %v596 = vlaneseq
  %v597 = vshrl.u32 %v596, 7
  %v598 = vsub.s32 6, %v597
  %v599 = vrot.slane %v19, %v598
  %v600 = vlaneseq
  %v601 = vshrl.u32 %v600, 7
  %v602 = vsub.s32 6, %v601
  %v603 = vrot.slane %v21, %v602
  %v604 = vlaneseq
  %v605 = vshrl.u32 %v604, 7
  %v606 = vsub.s32 6, %v605
  %v607 = vrot.slane %v23, %v606
  %v608 = vlaneseq
  %v609 = vshrl.u32 %v608, 7
  %v610 = vsub.s32 6, %v609
  %v611 = vrot.slane %v25, %v610
  %v612 = vmul.f32 %v11, %v583
  %v613 = vmul.f32 %v12, %v583
  %v614 = vmul.f32 %v13, %v587
  %v615 = vmul.f32 %v14, %v587
  %v616 = vmul.f32 %v15, %v591
  %v617 = vmul.f32 %v16, %v591
  %v618 = vmul.f32 %v17, %v595
  %v619 = vmul.f32 %v18, %v595
  %v620 = vmul.f32 %v19, %v599
  %v621 = vmul.f32 %v20, %v599
  %v622 = vmul.f32 %v21, %v603
  %v623 = vmul.f32 %v22, %v603
  %v624 = vmul.f32 %v23, %v607
  %v625 = vmul.f32 %v24, %v607
  %v626 = vmul.f32 %v25, %v611
  %v627 = vmul.f32 %v26, %v611
  %629 = vset.pattern.permute.xlu0 0
  %630 = vperm.xlu0 %629, %v34
  %v631 = vpop.permute.xlu0 %630
  %vm632 = vcmask 1041408
  %v633 = vrot.slane %v541, 6
  %v634 = vrot.slane %v631, 6
  %v635 = vsel %vm632, %v633, %v634
  %v638 = vmul.f32 %v612, %v635
  %v639 = vmul.f32 %v613, %v634
  %v640 = vmul.f32 %v614, %v635
  %v641 = vmul.f32 %v615, %v634
  %v642 = vmul.f32 %v616, %v635
  %v643 = vmul.f32 %v617, %v634
  %v644 = vmul.f32 %v618, %v635
  %v645 = vmul.f32 %v619, %v634
  %v646 = vmul.f32 %v620, %v635
  %v647 = vmul.f32 %v621, %v634
  %v648 = vmul.f32 %v622, %v635
  %v649 = vmul.f32 %v623, %v634
  %v650 = vmul.f32 %v624, %v635
  %v651 = vmul.f32 %v625, %v634
  %v652 = vmul.f32 %v626, %v635
  %v653 = vmul.f32 %v627, %v634
  %654 = vst.msk [vmem:[%s2 + $0x36] sm:$0xff] %vm112, %v638
  %655 = vst.msk [vmem:[%s2 + $0x3e] sm:$0x1] %vm114, %v639
  %656 = vst.msk [vmem:[%s2 + $0x8e] sm:$0xff] %vm112, %v640
  %657 = vst.msk [vmem:[%s2 + $0x96] sm:$0x1] %vm114, %v641
  %658 = vst.msk [vmem:[%s2 + $0xe6] sm:$0xff] %vm112, %v642
  %659 = vst.msk [vmem:[%s2 + $0xee] sm:$0x1] %vm114, %v643
  %660 = vst.msk [vmem:[%s2 + $0x13e] sm:$0xff] %vm112, %v644
  %661 = vst.msk [vmem:[%s2 + $0x146] sm:$0x1] %vm114, %v645
  %662 = vst.msk [vmem:[%s2 + $0x196] sm:$0xff] %vm112, %v646
  %663 = vst.msk [vmem:[%s2 + $0x19e] sm:$0x1] %vm114, %v647
  %664 = vst.msk [vmem:[%s2 + $0x1ee] sm:$0xff] %vm112, %v648
  %665 = vst.msk [vmem:[%s2 + $0x1f6] sm:$0x1] %vm114, %v649
  %666 = vst.msk [vmem:[%s2 + $0x246] sm:$0xff] %vm112, %v650
  %667 = vst.msk [vmem:[%s2 + $0x24e] sm:$0x1] %vm114, %v651
  %668 = vst.msk [vmem:[%s2 + $0x29e] sm:$0xff] %vm112, %v652
  %669 = vst.msk [vmem:[%s2 + $0x2a6] sm:$0x1] %vm114, %v653
  %v670 = vlaneseq
  %v671 = vshrl.u32 %v670, 7
  %v672 = vsub.s32 7, %v671
  %v673 = vrot.slane %v11, %v672
  %v674 = vlaneseq
  %v675 = vshrl.u32 %v674, 7
  %v676 = vsub.s32 7, %v675
  %v677 = vrot.slane %v13, %v676
  %v678 = vlaneseq
  %v679 = vshrl.u32 %v678, 7
  %v680 = vsub.s32 7, %v679
  %v681 = vrot.slane %v15, %v680
  %v682 = vlaneseq
  %v683 = vshrl.u32 %v682, 7
  %v684 = vsub.s32 7, %v683
  %v685 = vrot.slane %v17, %v684
  %v686 = vlaneseq
  %v687 = vshrl.u32 %v686, 7
  %v688 = vsub.s32 7, %v687
  %v689 = vrot.slane %v19, %v688
  %v690 = vlaneseq
  %v691 = vshrl.u32 %v690, 7
  %v692 = vsub.s32 7, %v691
  %v693 = vrot.slane %v21, %v692
  %v694 = vlaneseq
  %v695 = vshrl.u32 %v694, 7
  %v696 = vsub.s32 7, %v695
  %v697 = vrot.slane %v23, %v696
  %v698 = vlaneseq
  %v699 = vshrl.u32 %v698, 7
  %v700 = vsub.s32 7, %v699
  %v701 = vrot.slane %v25, %v700
  %v702 = vmul.f32 %v11, %v673
  %v703 = vmul.f32 %v12, %v673
  %v704 = vmul.f32 %v13, %v677
  %v705 = vmul.f32 %v14, %v677
  %v706 = vmul.f32 %v15, %v681
  %v707 = vmul.f32 %v16, %v681
  %v708 = vmul.f32 %v17, %v685
  %v709 = vmul.f32 %v18, %v685
  %v710 = vmul.f32 %v19, %v689
  %v711 = vmul.f32 %v20, %v689
  %v712 = vmul.f32 %v21, %v693
  %v713 = vmul.f32 %v22, %v693
  %v714 = vmul.f32 %v23, %v697
  %v715 = vmul.f32 %v24, %v697
  %v716 = vmul.f32 %v25, %v701
  %v717 = vmul.f32 %v26, %v701
  %719 = vset.pattern.permute.xlu0 0
  %720 = vperm.xlu0 %719, %v35
  %v721 = vpop.permute.xlu0 %720
  %vm722 = vcmask 1040384
  %v723 = vrot.slane %v631, 7
  %v724 = vrot.slane %v721, 7
  %v725 = vsel %vm722, %v723, %v724
  %v728 = vmul.f32 %v702, %v725
  %v729 = vmul.f32 %v703, %v724
  %v730 = vmul.f32 %v704, %v725
  %v731 = vmul.f32 %v705, %v724
  %v732 = vmul.f32 %v706, %v725
  %v733 = vmul.f32 %v707, %v724
  %v734 = vmul.f32 %v708, %v725
  %v735 = vmul.f32 %v709, %v724
  %v736 = vmul.f32 %v710, %v725
  %v737 = vmul.f32 %v711, %v724
  %v738 = vmul.f32 %v712, %v725
  %v739 = vmul.f32 %v713, %v724
  %v740 = vmul.f32 %v714, %v725
  %v741 = vmul.f32 %v715, %v724
  %v742 = vmul.f32 %v716, %v725
  %v743 = vmul.f32 %v717, %v724
  %744 = vst.msk [vmem:[%s2 + $0x3f] sm:$0xff] %vm112, %v728
  %745 = vst.msk [vmem:[%s2 + $0x47] sm:$0x1] %vm114, %v729
  %746 = vst.msk [vmem:[%s2 + $0x97] sm:$0xff] %vm112, %v730
  %747 = vst.msk [vmem:[%s2 + $0x9f] sm:$0x1] %vm114, %v731
  %748 = vst.msk [vmem:[%s2 + $0xef] sm:$0xff] %vm112, %v732
  %749 = vst.msk [vmem:[%s2 + $0xf7] sm:$0x1] %vm114, %v733
  %750 = vst.msk [vmem:[%s2 + $0x147] sm:$0xff] %vm112, %v734
  %751 = vst.msk [vmem:[%s2 + $0x14f] sm:$0x1] %vm114, %v735
  %752 = vst.msk [vmem:[%s2 + $0x19f] sm:$0xff] %vm112, %v736
  %753 = vst.msk [vmem:[%s2 + $0x1a7] sm:$0x1] %vm114, %v737
  %754 = vst.msk [vmem:[%s2 + $0x1f7] sm:$0xff] %vm112, %v738
  %755 = vst.msk [vmem:[%s2 + $0x1ff] sm:$0x1] %vm114, %v739
  %756 = vst.msk [vmem:[%s2 + $0x24f] sm:$0xff] %vm112, %v740
  %757 = vst.msk [vmem:[%s2 + $0x257] sm:$0x1] %vm114, %v741
  %758 = vst.msk [vmem:[%s2 + $0x2a7] sm:$0xff] %vm112, %v742
  %759 = vst.msk [vmem:[%s2 + $0x2af] sm:$0x1] %vm114, %v743
  %v760 = vlaneseq
  %v761 = vshrl.u32 %v760, 7
  %v762 = vsub.s32 0, %v761
  %v763 = vrot.slane %v12, %v762
  %v764 = vlaneseq
  %v765 = vshrl.u32 %v764, 7
  %v766 = vsub.s32 0, %v765
  %v767 = vrot.slane %v14, %v766
  %v768 = vlaneseq
  %v769 = vshrl.u32 %v768, 7
  %v770 = vsub.s32 0, %v769
  %v771 = vrot.slane %v16, %v770
  %v772 = vlaneseq
  %v773 = vshrl.u32 %v772, 7
  %v774 = vsub.s32 0, %v773
  %v775 = vrot.slane %v18, %v774
  %v776 = vlaneseq
  %v777 = vshrl.u32 %v776, 7
  %v778 = vsub.s32 0, %v777
  %v779 = vrot.slane %v20, %v778
  %v780 = vlaneseq
  %v781 = vshrl.u32 %v780, 7
  %v782 = vsub.s32 0, %v781
  %v783 = vrot.slane %v22, %v782
  %v784 = vlaneseq
  %v785 = vshrl.u32 %v784, 7
  %v786 = vsub.s32 0, %v785
  %v787 = vrot.slane %v24, %v786
  %v788 = vlaneseq
  %v789 = vshrl.u32 %v788, 7
  %v790 = vsub.s32 0, %v789
  %v791 = vrot.slane %v26, %v790
  %v792 = vmul.f32 %v11, %v763
  %v793 = vmul.f32 %v12, %v763
  %v794 = vmul.f32 %v13, %v767
  %v795 = vmul.f32 %v14, %v767
  %v796 = vmul.f32 %v15, %v771
  %v797 = vmul.f32 %v16, %v771
  %v798 = vmul.f32 %v17, %v775
  %v799 = vmul.f32 %v18, %v775
  %v800 = vmul.f32 %v19, %v779
  %v801 = vmul.f32 %v20, %v779
  %v802 = vmul.f32 %v21, %v783
  %v803 = vmul.f32 %v22, %v783
  %v804 = vmul.f32 %v23, %v787
  %v805 = vmul.f32 %v24, %v787
  %v806 = vmul.f32 %v25, %v791
  %v807 = vmul.f32 %v26, %v791
  %809 = vset.pattern.permute.xlu0 0
  %810 = vperm.xlu0 %809, %v36
  %v811 = vpop.permute.xlu0 %810
  %814 = vset.pattern.permute.xlu0 0
  %815 = vperm.xlu0 %814, %v37
  %v816 = vpop.permute.xlu0 %815
  %v818 = vmul.f32 %v792, %v811
  %v819 = vmul.f32 %v793, %v816
  %v820 = vmul.f32 %v794, %v811
  %v821 = vmul.f32 %v795, %v816
  %v822 = vmul.f32 %v796, %v811
  %v823 = vmul.f32 %v797, %v816
  %v824 = vmul.f32 %v798, %v811
  %v825 = vmul.f32 %v799, %v816
  %v826 = vmul.f32 %v800, %v811
  %v827 = vmul.f32 %v801, %v816
  %v828 = vmul.f32 %v802, %v811
  %v829 = vmul.f32 %v803, %v816
  %v830 = vmul.f32 %v804, %v811
  %v831 = vmul.f32 %v805, %v816
  %v832 = vmul.f32 %v806, %v811
  %v833 = vmul.f32 %v807, %v816
  %834 = vst.msk [vmem:[%s2 + $0x48] sm:$0xff] %vm112, %v818
  %835 = vst.msk [vmem:[%s2 + $0x50] sm:$0x1] %vm114, %v819
  %836 = vst.msk [vmem:[%s2 + $0xa0] sm:$0xff] %vm112, %v820
  %837 = vst.msk [vmem:[%s2 + $0xa8] sm:$0x1] %vm114, %v821
  %838 = vst.msk [vmem:[%s2 + $0xf8] sm:$0xff] %vm112, %v822
  %839 = vst.msk [vmem:[%s2 + $0x100] sm:$0x1] %vm114, %v823
  %840 = vst.msk [vmem:[%s2 + $0x150] sm:$0xff] %vm112, %v824
  %841 = vst.msk [vmem:[%s2 + $0x158] sm:$0x1] %vm114, %v825
  %842 = vst.msk [vmem:[%s2 + $0x1a8] sm:$0xff] %vm112, %v826
  %843 = vst.msk [vmem:[%s2 + $0x1b0] sm:$0x1] %vm114, %v827
  %844 = vst.msk [vmem:[%s2 + $0x200] sm:$0xff] %vm112, %v828
  %845 = vst.msk [vmem:[%s2 + $0x208] sm:$0x1] %vm114, %v829
  %846 = vst.msk [vmem:[%s2 + $0x258] sm:$0xff] %vm112, %v830
  %847 = vst.msk [vmem:[%s2 + $0x260] sm:$0x1] %vm114, %v831
  %848 = vst.msk [vmem:[%s2 + $0x2b0] sm:$0xff] %vm112, %v832
  %849 = vst.msk [vmem:[%s2 + $0x2b8] sm:$0x1] %vm114, %v833
  // Predicated region
  $region10: #{tpu_custom_call.1} parent=0 // pred_check
    _
  $region11: #{tpu_custom_call.1} parent=0 // pred_check_branch
    %851 = sbr.rel (0) target = $region13
  $region12: #{tpu_custom_call.1} parent=0 // pred_region
    _
  $region13: #{tpu_custom_call.1} parent=0 // pred_fallthru
    _
  // Predicated region
  $region14: #{tpu_custom_call.1} parent=0 // pred_check
    _
  $region15: #{tpu_custom_call.1} parent=0 // pred_check_branch
    %853 = sbr.rel (0) target = $region17
  $region16: #{tpu_custom_call.1} parent=0 // pred_region
    _
  $region17: #{tpu_custom_call.1} parent=0 // pred_fallthru
    _

</llo_original>
